<compile_context>
chip_gen: v6e
topology: v6e:2x2x1
jax: 0.10.0
libtpu: 0.0.40
codegen_flags: <defaults>
</compile_context>

<pallas_src>
import jax
import jax.numpy as jnp
from jax import lax
from jax.experimental import pallas as pl
from jax.experimental.pallas import tpu as pltpu


# 3 inputs + 1 output, double-buffered (8 block copies), plus ~4 block-sized
# f32 in-kernel temporaries (reshaped operand values, pre-cast f32 output).
_VMEM_MULT = 12


def _axial_attn_kernel(x_ref, xt_ref, g_ref, o_ref):
    # Block shapes are (TB, C, D, HW) in native (channel-major) layout.
    tb, C, D, HW = x_ref.shape
    G = tb * C  # merged (batch-block, channel) group axis for batched matmuls

    # ---- attention scores: S[b] = sum_c x[b, c] @ xt[b, c]^T, f32 accumulation.
    # One batched NT dot_general over all (b, c) groups (contracting the lane
    # axis of both operands), then a leading-axis channel reduce (VPU adds).
    x = x_ref[...].reshape(G, D, HW)
    xt = xt_ref[...].reshape(G, D, HW)
    s_bc = lax.dot_general(x, xt, (((2,), (2,)), ((0,), (0,))),
                           preferred_element_type=jnp.float32)   # (G, D, D)
    s = jnp.sum(s_bc.reshape(tb, C, D, D), axis=1)               # (tb, D, D)

    # ---- numerically-stable softmax along the last axis (== F.softmax).
    s = s - jnp.max(s, axis=-1, keepdims=True)
    p = jnp.exp(s)
    # Exact reciprocal: the approx EUP form (~1e-3 rel err) would miss 1e-4.
    p = p * pl.reciprocal(jnp.sum(p, axis=-1, keepdims=True), approx=False)

    # ---- output: O[b, c] = P[b] @ g[b, c].  Broadcast P over the (tiny) channel
    # axis and run ONE batched dot_general; store the whole block as a single
    # lane-dense slab in the native layout (no output transpose anywhere).
    p_bc = jnp.broadcast_to(p[:, None, :, :], (tb, C, D, D)).reshape(G, D, D)
    p_bc = p_bc.astype(g_ref.dtype)
    g = g_ref[...].reshape(G, D, HW)
    o = lax.dot_general(p_bc, g, (((2,), (1,)), ((0,), (0,))),
                        preferred_element_type=jnp.float32)      # (G, D, HW)
    o_ref[...] = o.reshape(tb, C, D, HW).astype(o_ref.dtype)


def _vmem_policy():
    """Return (block_budget_bytes, vmem_limit_cap_bytes, min_grid_steps)."""
    vmem_cap = None
    try:
        vmem_cap = int(pltpu.get_tpu_info().vmem_capacity_bytes)
    except Exception:
        vmem_cap = None  # unknown: fall through to the most conservative policy
    if vmem_cap is None or vmem_cap <= (64 << 20):
        # v7x-like: 64 MiB per TensorCore, 2 TCs per chip.  Modest block budget,
        # scoped limit well under the ceiling (headroom for compiler scratch),
        # and >= 2 parallel grid steps so both cores get work.
        return 24 << 20, 40 << 20, 2
    # v5e / v6e: 128 MiB physical VMEM, single TensorCore.  Maximize the batch
    # block; per-grid-step overhead dominates this tiny-per-batch workload.
    return 80 << 20, 100 << 20, 1


def _pick_batch_block(B, per_batch_bytes, block_budget_bytes, min_grid_steps):
    """Largest tb dividing B such that the grid keeps >= min_grid_steps steps
    (when B allows it) and the blocked working set fits the VMEM budget."""
    best = 1
    for tb in range(1, B + 1):
        if B % tb:
            continue
        if (B // tb) < min(min_grid_steps, B):
            continue
        if _VMEM_MULT * tb * per_batch_bytes > block_budget_bytes:
            continue
        best = tb
    return best


def sa_axial_block(x_, x_t, g_x):
    """Pallas implementation of saAxialBlock.forward.

    Args:
      x_, x_t, g_x: (B, C, D, H, W) float32 arrays (PyTorch NCDHW layout).
    Returns:
      (B, C, D, H, W) float32 array.
    """
    B, C, D, H, W = x_.shape
    HW = H * W

    # Free reshapes (merge of trailing contiguous dims) -- no HBM layout traffic.
    x4 = x_.reshape(B, C, D, HW)
    xt4 = x_t.reshape(B, C, D, HW)
    g4 = g_x.reshape(B, C, D, HW)

    itemsize = jnp.dtype(x_.dtype).itemsize
    per_batch_bytes = C * D * HW * itemsize

    block_budget, limit_cap, min_steps = _vmem_policy()
    tb = _pick_batch_block(B, per_batch_bytes, block_budget, min_steps)
    # TODO(synk): if a single batch element (C*D*HW) ever exceeds the VMEM
    # budget, add a trailing "arbitrary" channel/spatial grid axis with a
    # (D, D) scratch accumulator and a second output pass.
    # TODO(synk): for B == 1 on 2-TC parts (v7x), add a second "parallel" grid
    # axis over depth(query) tiles so both TensorCores get work.

    # vmem_limit derived from the same working-set estimate as the budget check.
    required = _VMEM_MULT * tb * per_batch_bytes
    vmem_limit = int(min(limit_cap, max(required + (2 << 20), 16 << 20)))

    blk = pl.BlockSpec((tb, C, D, HW), lambda b: (b, 0, 0, 0))

    out4 = pl.pallas_call(
        _axial_attn_kernel,
        out_shape=jax.ShapeDtypeStruct((B, C, D, HW), x_.dtype),
        grid_spec=pltpu.PrefetchScalarGridSpec(
            num_scalar_prefetch=0,
            grid=(B // tb,),
            in_specs=[blk, blk, blk],
            out_specs=blk,
        ),
        compiler_params=pltpu.CompilerParams(
            dimension_semantics=("parallel",),
            vmem_limit_bytes=vmem_limit,
        ),
    )(x4, xt4, g4)

    return out4.reshape(B, C, D, H, W)


def _reference(x_, x_t, g_x):
    # Pure-JAX reference mirroring the PyTorch code exactly.
    B, C, D, H, W = x_.shape
    x_f = jnp.transpose(x_, (0, 2, 1, 3, 4)).reshape(B, D, -1)
    g_f = jnp.transpose(g_x, (0, 2, 1, 3, 4)).reshape(B, D, -1)
    xt_f = jnp.transpose(x_t, (0, 2, 1, 3, 4)).reshape(B, D, -1)
    xt_f = jnp.transpose(xt_f, (0, 2, 1))
    att = jnp.matmul(x_f, xt_f)
    att = jax.nn.softmax(att, axis=-1)
    out = jnp.matmul(att, g_f)
    out = out.reshape(B, D, C, H, W)
    return jnp.transpose(out, (0, 2, 1, 3, 4))


if __name__ == "__main__":
    B, C, D, H, W = 2, 4, 8, 16, 16
    key = jax.random.PRNGKey(0)
    k1, k2, k3 = jax.random.split(key, 3)
    x_ = jax.random.normal(k1, (B, C, D, H, W), dtype=jnp.float32)
    x_t = jax.random.normal(k2, (B, C, D, H, W), dtype=jnp.float32)
    g_x = jax.random.normal(k3, (B, C, D, H, W), dtype=jnp.float32)

    out = jax.block_until_ready(sa_axial_block(x_, x_t, g_x))
    ref = jax.block_until_ready(_reference(x_, x_t, g_x))

    assert out.shape == (B, C, D, H, W)
    assert jnp.allclose(out, ref, atol=1e-4, rtol=1e-4)
    print("KERNEL_OK")
</pallas_src>

<mosaic_0001>
module attributes {stable_mosaic.version = 11 : i64} {
  func.func @_axial_attn_kernel(%arg0: i32, %arg1: memref<1x4x8x256xf32, #tpu.memory_space<vmem>>, %arg2: memref<1x4x8x256xf32, #tpu.memory_space<vmem>>, %arg3: memref<1x4x8x256xf32, #tpu.memory_space<vmem>>, %arg4: memref<1x4x8x256xf32, #tpu.memory_space<vmem>>) attributes {dimension_semantics = [#tpu.dimension_semantics<parallel>], iteration_bounds = array<i64: 2>, scalar_prefetch = 0 : i64, scratch_operands = 0 : i64, tpu.core_type = #tpu.core_type<tc>, window_params = [{transform_indices = @transform_0, window_bounds = array<i64: 1, 4, 8, 256>}, {transform_indices = @transform_1, window_bounds = array<i64: 1, 4, 8, 256>}, {transform_indices = @transform_2, window_bounds = array<i64: 1, 4, 8, 256>}, {transform_indices = @transform_3, window_bounds = array<i64: 1, 4, 8, 256>}]} {
    %c0 = arith.constant 0 : index
    %c0_0 = arith.constant 0 : index
    %c0_1 = arith.constant 0 : index
    %c0_2 = arith.constant 0 : index
    %0 = vector.load %arg1[%c0, %c0_0, %c0_1, %c0_2] : memref<1x4x8x256xf32, #tpu.memory_space<vmem>>, vector<1x4x8x256xf32>
    %1 = vector.shape_cast %0 : vector<1x4x8x256xf32> to vector<4x8x256xf32>
    %c0_3 = arith.constant 0 : index
    %c0_4 = arith.constant 0 : index
    %c0_5 = arith.constant 0 : index
    %c0_6 = arith.constant 0 : index
    %2 = vector.load %arg2[%c0_3, %c0_4, %c0_5, %c0_6] : memref<1x4x8x256xf32, #tpu.memory_space<vmem>>, vector<1x4x8x256xf32>
    %3 = vector.shape_cast %2 : vector<1x4x8x256xf32> to vector<4x8x256xf32>
    %cst = arith.constant dense<0.000000e+00> : vector<4x8x8xf32>
    %4 = tpu.matmul %1, %3, %cst {dimension_numbers = #tpu.dot_dimension_numbers<[2], [2], [1], [1], [0, 0, 0, 1, 1, 1], [0], [0]>} : vector<4x8x256xf32>, vector<4x8x256xf32>, vector<4x8x8xf32> -> vector<4x8x8xf32>
    %5 = vector.shape_cast %4 : vector<4x8x8xf32> to vector<1x4x8x8xf32>
    %cst_7 = arith.constant dense<0.000000e+00> : vector<1x8x8xf32>
    %6 = vector.multi_reduction <add>, %5, %cst_7 [1] : vector<1x4x8x8xf32> to vector<1x8x8xf32>
    %cst_8 = arith.constant dense<0xFF800000> : vector<1x8xf32>
    %7 = vector.multi_reduction <maximumf>, %6, %cst_8 [2] : vector<1x8x8xf32> to vector<1x8xf32>
    %8 = vector.shape_cast %7 : vector<1x8xf32> to vector<1x8x1xf32>
    %9 = vector.broadcast %8 : vector<1x8x1xf32> to vector<1x8x8xf32>
    %10 = arith.subf %6, %9 : vector<1x8x8xf32>
    %11 = math.exp %10 : vector<1x8x8xf32>
    %cst_9 = arith.constant dense<0.000000e+00> : vector<1x8xf32>
    %12 = vector.multi_reduction <add>, %11, %cst_9 [2] : vector<1x8x8xf32> to vector<1x8xf32>
    %13 = vector.shape_cast %12 : vector<1x8xf32> to vector<1x8x1xf32>
    %14 = tpu.reciprocal %13 : vector<1x8x1xf32> -> vector<1x8x1xf32>
    %15 = vector.broadcast %14 : vector<1x8x1xf32> to vector<1x8x8xf32>
    %16 = arith.mulf %11, %15 : vector<1x8x8xf32>
    %17 = vector.shape_cast %16 : vector<1x8x8xf32> to vector<1x1x8x8xf32>
    %18 = vector.shape_cast %17 : vector<1x1x8x8xf32> to vector<1x1x8x8xf32>
    %19 = vector.broadcast %18 : vector<1x1x8x8xf32> to vector<1x4x8x8xf32>
    %20 = vector.shape_cast %19 : vector<1x4x8x8xf32> to vector<4x8x8xf32>
    %c0_10 = arith.constant 0 : index
    %c0_11 = arith.constant 0 : index
    %c0_12 = arith.constant 0 : index
    %c0_13 = arith.constant 0 : index
    %21 = vector.load %arg3[%c0_10, %c0_11, %c0_12, %c0_13] : memref<1x4x8x256xf32, #tpu.memory_space<vmem>>, vector<1x4x8x256xf32>
    %22 = vector.shape_cast %21 : vector<1x4x8x256xf32> to vector<4x8x256xf32>
    %cst_14 = arith.constant dense<0.000000e+00> : vector<4x8x256xf32>
    %23 = tpu.matmul %20, %22, %cst_14 {dimension_numbers = #tpu.dot_dimension_numbers<[2], [1], [1], [2], [0, 0, 0, 1, 1, 2], [0], [0]>} : vector<4x8x8xf32>, vector<4x8x256xf32>, vector<4x8x256xf32> -> vector<4x8x256xf32>
    %24 = vector.shape_cast %23 : vector<4x8x256xf32> to vector<1x4x8x256xf32>
    %c0_15 = arith.constant 0 : index
    %c0_16 = arith.constant 0 : index
    %c0_17 = arith.constant 0 : index
    %c0_18 = arith.constant 0 : index
    %25 = vector.load %arg4[%c0_15, %c0_16, %c0_17, %c0_18] : memref<1x4x8x256xf32, #tpu.memory_space<vmem>>, vector<1x4x8x256xf32>
    tpu.vector_store %arg4[%c0_15, %c0_16, %c0_17, %c0_18], %24 {strides = array<i32>} : memref<1x4x8x256xf32, #tpu.memory_space<vmem>>, vector<1x4x8x256xf32>,
    return
  }
  func.func @transform_0(%arg0: i32) -> (i32, i32, i32, i32) {
    %c0_i32 = arith.constant 0 : i32
    %c0_i32_0 = arith.constant 0 : i32
    %c0_i32_1 = arith.constant 0 : i32
    %c0_i32_2 = arith.constant 0 : i32
    return %arg0, %c0_i32, %c0_i32_0, %c0_i32_1 : i32, i32, i32, i32
  }
  func.func @transform_1(%arg0: i32) -> (i32, i32, i32, i32) {
    %c0_i32 = arith.constant 0 : i32
    %c0_i32_0 = arith.constant 0 : i32
    %c0_i32_1 = arith.constant 0 : i32
    %c0_i32_2 = arith.constant 0 : i32
    return %arg0, %c0_i32, %c0_i32_0, %c0_i32_1 : i32, i32, i32, i32
  }
  func.func @transform_2(%arg0: i32) -> (i32, i32, i32, i32) {
    %c0_i32 = arith.constant 0 : i32
    %c0_i32_0 = arith.constant 0 : i32
    %c0_i32_1 = arith.constant 0 : i32
    %c0_i32_2 = arith.constant 0 : i32
    return %arg0, %c0_i32, %c0_i32_0, %c0_i32_1 : i32, i32, i32, i32
  }
  func.func @transform_3(%arg0: i32) -> (i32, i32, i32, i32) {
    %c0_i32 = arith.constant 0 : i32
    %c0_i32_0 = arith.constant 0 : i32
    %c0_i32_1 = arith.constant 0 : i32
    %c0_i32_2 = arith.constant 0 : i32
    return %arg0, %c0_i32, %c0_i32_0, %c0_i32_1 : i32, i32, i32, i32
  }
}

</mosaic_0001>

<llo_original>
// kernel: tpu_custom_call.1
$region0: #{tpu_custom_call.1}
  #allocation0 [shape = 'u32[]', space=smem, size = 0x4, offset = 0x4, fixed_abs, tag = 'smem constant byte address 0x4 - core index']
  #allocation1 [shape = 'u32[144,128]{1,0:T(1,128)}', space=vmem, size = 0x12000, scoped, tag = 'internal scratch']
  %s0 = inlined_call_operand.hbm [shape: f32[2,4,8,256], index: 0, kind: input, shape index: {}]
  %s1 = inlined_call_operand.hbm [shape: f32[2,4,8,256], index: 1, kind: input, shape index: {}]
  %s2 = inlined_call_operand.hbm [shape: f32[2,4,8,256], index: 2, kind: input, shape index: {}]
  %s3 = inlined_call_operand.hbm [shape: f32[2,4,8,256], index: 3, kind: output, shape index: {}]
  %s4 = sld [smem:[#allocation0]]
  $region57: #{tpu_custom_call.1} parent=0
    _
  %s6 = ssub.s32 1, %s4
  %s7 = scalar_select 0, %s6, %s4
  $region1: #{tpu_custom_call.1} parent=0
    #allocation2 [shape = 'u8[65536]{0}', space=vmem, size = 0x10000, scoped, tag = 'input window, operand 0']
    #allocation3 [shape = 's32[2]{0}', space=sflag, size = 0x8, scoped, tag = 'scoped memory for tpu_custom_call.1']
    #allocation4 [shape = 's32[2]{0}', space=sflag, size = 0x8, scoped, tag = 'scoped memory for tpu_custom_call.1']
    #allocation5 [shape = 'u8[65536]{0}', space=vmem, size = 0x10000, scoped, tag = 'input window, operand 1']
    #allocation6 [shape = 's32[2]{0}', space=sflag, size = 0x8, scoped, tag = 'scoped memory for tpu_custom_call.1']
    #allocation7 [shape = 'u8[65536]{0}', space=vmem, size = 0x10000, scoped, tag = 'input window, operand 2']
    #allocation8 [shape = 'u8[65536]{0}', space=vmem, size = 0x10000, scoped, tag = 'output window, operand 0']
    %8 = vsyncpa [#allocation3], 0
    %s9 = scalar_lea.sflag [#allocation3], 1
    %10 = vsyncpa %s9, 0
    %11 = vsyncpa [#allocation6], 0
    %s12 = scalar_lea.sflag [#allocation6], 1
    %13 = vsyncpa %s12, 0
    %14 = vsyncpa [#allocation4], 0
    %s15 = scalar_lea.sflag [#allocation4], 1
    %16 = vsyncpa %s15, 0
    loop: start=0, step=1, limit=4
    $region2: #{tpu_custom_call.1} parent=1 // loop_pre_header
      _
    $region3: #{tpu_custom_call.1} parent=1 // loop_header
      %s18 = sphi 0, %s22
      %p19 = scmp.ge.s32.totalorder %s18, 4
      %s28 = sphi 0, %s30
      %s31 = sphi 0, %s28
      %s32 = sphi 0, %s31
      %s48 = sphi 0, %s32
      %s54 = sphi 0, %s56
      %s57 = sphi 0, %s54
      %s58 = sphi 0, %s57
      %s74 = sphi 0, %s58
      %s80 = sphi 0, %s82
      %s83 = sphi 0, %s80
      %s84 = sphi 0, %s83
      %s100 = sphi 0, %s84
      %s106 = sphi 0, %s108
      %s109 = sphi 0, %s106
      %s110 = sphi 0, %s109
      %s126 = sphi 0, %s110
    $region4: #{tpu_custom_call.1} parent=1 // loop_header_branch
      %21 = sbr.rel (%p19) target = $region8
    $region5: #{tpu_custom_call.1} parent=1 // loop_body
      %s23 = ssub.s32 %s18, 1
      %s24 = ssub.s32 %s18, 2
      %s25 = sadd.s32 %s18, 1
      %s26 = ssub.s32 %s18, %s25
      %p27 = scmp.eq.s32.totalorder %s26, 0
      %s29 = sadd.s32 %s28, 1
      %s30 = scalar_select %p27, %s28, %s29
      %p33 = pneg %p27
      %p34 = scmp.eq.s32.totalorder %s18, 1
      %p35 = por %p33, %p34
      %p36 = scmp.ne.s32.totalorder %s28, %s31
      %p37 = scmp.eq.s32.totalorder %s18, 0
      %p38 = por %p36, %p37
      %p39 = scmp.ne.s32.totalorder %s28, %s31
      %p40 = scmp.eq.s32.totalorder %s23, 1
      %p41 = por %p39, %p40
      %p42 = scmp.ne.s32.totalorder %s31, %s32
      %p43 = scmp.eq.s32.totalorder %s23, 0
      %p44 = por %p42, %p43
      %p45 = scmp.ne.s32.totalorder %s31, %s32
      %p46 = scmp.eq.s32.totalorder %s24, 1
      %p47 = por %p45, %p46
      %p49 = scmp.ne.s32.totalorder %s32, %s48
      %p50 = scmp.eq.s32.totalorder %s24, 0
      %p51 = por %p49, %p50
      %s52 = ssub.s32 %s18, %s25
      %p53 = scmp.eq.s32.totalorder %s52, 0
      %s55 = sadd.s32 %s54, 1
      %s56 = scalar_select %p53, %s54, %s55
      %p59 = pneg %p53
      %p60 = scmp.eq.s32.totalorder %s18, 1
      %p61 = por %p59, %p60
      %p62 = scmp.ne.s32.totalorder %s54, %s57
      %p63 = scmp.eq.s32.totalorder %s18, 0
      %p64 = por %p62, %p63
      %p65 = scmp.ne.s32.totalorder %s54, %s57
      %p66 = scmp.eq.s32.totalorder %s23, 1
      %p67 = por %p65, %p66
      %p68 = scmp.ne.s32.totalorder %s57, %s58
      %p69 = scmp.eq.s32.totalorder %s23, 0
      %p70 = por %p68, %p69
      %p71 = scmp.ne.s32.totalorder %s57, %s58
      %p72 = scmp.eq.s32.totalorder %s24, 1
      %p73 = por %p71, %p72
      %p75 = scmp.ne.s32.totalorder %s58, %s74
      %p76 = scmp.eq.s32.totalorder %s24, 0
      %p77 = por %p75, %p76
      %s78 = ssub.s32 %s18, %s25
      %p79 = scmp.eq.s32.totalorder %s78, 0
      %s81 = sadd.s32 %s80, 1
      %s82 = scalar_select %p79, %s80, %s81
      %p85 = pneg %p79
      %p86 = scmp.eq.s32.totalorder %s18, 1
      %p87 = por %p85, %p86
      %p88 = scmp.ne.s32.totalorder %s80, %s83
      %p89 = scmp.eq.s32.totalorder %s18, 0
      %p90 = por %p88, %p89
      %p91 = scmp.ne.s32.totalorder %s80, %s83
      %p92 = scmp.eq.s32.totalorder %s23, 1
      %p93 = por %p91, %p92
      %p94 = scmp.ne.s32.totalorder %s83, %s84
      %p95 = scmp.eq.s32.totalorder %s23, 0
      %p96 = por %p94, %p95
      %p97 = scmp.ne.s32.totalorder %s83, %s84
      %p98 = scmp.eq.s32.totalorder %s24, 1
      %p99 = por %p97, %p98
      %p101 = scmp.ne.s32.totalorder %s84, %s100
      %p102 = scmp.eq.s32.totalorder %s24, 0
      %p103 = por %p101, %p102
      %s104 = ssub.s32 %s18, %s25
      %p105 = scmp.eq.s32.totalorder %s104, 0
      %s107 = sadd.s32 %s106, 1
      %s108 = scalar_select %p105, %s106, %s107
      %p111 = pneg %p105
      %p112 = scmp.eq.s32.totalorder %s18, 1
      %p113 = por %p111, %p112
      %p114 = scmp.ne.s32.totalorder %s106, %s109
      %p115 = scmp.eq.s32.totalorder %s18, 0
      %p116 = por %p114, %p115
      %p117 = scmp.ne.s32.totalorder %s106, %s109
      %p118 = scmp.eq.s32.totalorder %s23, 1
      %p119 = por %p117, %p118
      %p120 = scmp.ne.s32.totalorder %s109, %s110
      %p121 = scmp.eq.s32.totalorder %s23, 0
      %p122 = por %p120, %p121
      %p123 = scmp.ne.s32.totalorder %s109, %s110
      %p124 = scmp.eq.s32.totalorder %s24, 1
      %p125 = por %p123, %p124
      %p127 = scmp.ne.s32.totalorder %s110, %s126
      %p128 = scmp.eq.s32.totalorder %s24, 0
      %p129 = por %p127, %p128
      %p130 = scmp.le.s32.totalorder 1, %s18
      %p131 = scmp.lt.s32.totalorder %s18, 3
      %p132 = pnand %p130, %p131
      %p133 = pneg %p132
      // Predicated region
      $region9: #{tpu_custom_call.1} parent=5 // pred_check
        _
      $region10: #{tpu_custom_call.1} parent=5 // pred_check_branch
        %135 = sbr.rel (%p132) target = $region12
      $region11: #{tpu_custom_call.1} parent=5 // pred_region
        %s136 = ssub.s32 %s18, 1
      $region12: #{tpu_custom_call.1} parent=5 // pred_fallthru
        _
      %p137 = scmp.lt.s32.totalorder %s18, 2
      // Predicated region
      $region13: #{tpu_custom_call.1} parent=5 // pred_check
        %p138 = pneg %p137
      $region14: #{tpu_custom_call.1} parent=5 // pred_check_branch
        %140 = sbr.rel (%p138) target = $region16
      $region15: #{tpu_custom_call.1} parent=5 // pred_region
        // Predicated region
        $region17: #{tpu_custom_call.1} parent=15 // pred_check
          %p141 = pneg %p38
        $region18: #{tpu_custom_call.1} parent=15 // pred_check_branch
          %143 = sbr.rel (%p141) target = $region20
        $region19: #{tpu_custom_call.1} parent=15 // pred_region
          %s144 = sand.u32 %s28, 1
          %s145 = scalar_lea.sflag [#allocation3], %s144
          %s146 = sand.u32 %s28, 1
          %s147 = smul.addr %s146, 64
          %s148 = scalar_lea.vmem [#allocation2], %s147
          %s150 = ssub.s32 1024, 1024
          %151 = vsyncadd %s145, %s150
          %s152 = smul.addr %s18, 8
          %s153 = smul.addr %s152, 128
          %s154 = scalar_lea.hbm %s0, %s153
          %s155 = sshll.u32 %s148, 4
          %s156 = int_to_ptr.vmem [resolvable:$true] %s155
          %161 = dma.hbm_to_vmem [thread:$0]  %s154, 1024, %s156, %s145, 256, 256, 16
        $region20: #{tpu_custom_call.1} parent=15 // pred_fallthru
          _
        // Predicated region
        $region21: #{tpu_custom_call.1} parent=15 // pred_check
          %p162 = pneg %p64
        $region22: #{tpu_custom_call.1} parent=15 // pred_check_branch
          %164 = sbr.rel (%p162) target = $region24
        $region23: #{tpu_custom_call.1} parent=15 // pred_region
          %s165 = sand.u32 %s18, 1
          %s166 = scalar_lea.sflag [#allocation6], %s165
          %s167 = sand.u32 %s54, 1
          %s168 = smul.addr %s167, 64
          %s169 = scalar_lea.vmem [#allocation5], %s168
          %s171 = ssub.s32 1024, 1024
          %172 = vsyncadd %s166, %s171
          %s173 = smul.addr %s18, 8
          %s174 = smul.addr %s173, 128
          %s175 = scalar_lea.hbm %s1, %s174
          %s176 = sshll.u32 %s169, 4
          %s177 = int_to_ptr.vmem [resolvable:$true] %s176
          %182 = dma.hbm_to_vmem [thread:$0]  %s175, 1024, %s177, %s166, 256, 256, 16
        $region24: #{tpu_custom_call.1} parent=15 // pred_fallthru
          _
        // Predicated region
        $region25: #{tpu_custom_call.1} parent=15 // pred_check
          %p183 = pneg %p90
        $region26: #{tpu_custom_call.1} parent=15 // pred_check_branch
          %185 = sbr.rel (%p183) target = $region28
        $region27: #{tpu_custom_call.1} parent=15 // pred_region
          %s186 = sand.u32 %s18, 1
          %s187 = scalar_lea.sflag [#allocation6], %s186
          %s188 = sand.u32 %s80, 1
          %s189 = smul.addr %s188, 64
          %s190 = scalar_lea.vmem [#allocation7], %s189
          %s192 = ssub.s32 1024, 1024
          %193 = vsyncadd %s187, %s192
          %s194 = smul.addr %s18, 8
          %s195 = smul.addr %s194, 128
          %s196 = scalar_lea.hbm %s2, %s195
          %s197 = sshll.u32 %s190, 4
          %s198 = int_to_ptr.vmem [resolvable:$true] %s197
          %203 = dma.hbm_to_vmem [thread:$0]  %s196, 1024, %s198, %s187, 256, 256, 16
        $region28: #{tpu_custom_call.1} parent=15 // pred_fallthru
          _
      $region16: #{tpu_custom_call.1} parent=5 // pred_fallthru
        _
      %p204 = scmp.le.s32.totalorder 1, %s18
      %p205 = scmp.lt.s32.totalorder %s18, 3
      %p206 = pnand %p204, %p205
      %p207 = pneg %p206
      // Predicated region
      $region29: #{tpu_custom_call.1} parent=5 // pred_check
        _
      $region30: #{tpu_custom_call.1} parent=5 // pred_check_branch
        %209 = sbr.rel (%p206) target = $region32
      $region31: #{tpu_custom_call.1} parent=5 // pred_region
        %s210 = ssub.s32 %s18, 1
        %s211 = sand.u32 %s31, 1
        %s212 = scalar_lea.sflag [#allocation3], %s211
        %s213 = sand.u32 %s31, 1
        %s214 = smul.addr %s213, 64
        %s215 = scalar_lea.vmem [#allocation2], %s214
        // Predicated region
        $region33: #{tpu_custom_call.1} parent=31 // pred_check
          %p216 = pneg %p44
        $region34: #{tpu_custom_call.1} parent=31 // pred_check_branch
          %218 = sbr.rel (%p216) target = $region36
        $region35: #{tpu_custom_call.1} parent=31 // pred_region
          %219 = dma.done %s212, 1024
        $region36: #{tpu_custom_call.1} parent=31 // pred_fallthru
          _
        %s220 = sand.u32 %s23, 1
        %s221 = scalar_lea.sflag [#allocation6], %s220
        %s222 = sand.u32 %s57, 1
        %s223 = smul.addr %s222, 64
        %s224 = scalar_lea.vmem [#allocation5], %s223
        // Predicated region
        $region37: #{tpu_custom_call.1} parent=31 // pred_check
          %p225 = pneg %p70
        $region38: #{tpu_custom_call.1} parent=31 // pred_check_branch
          %227 = sbr.rel (%p225) target = $region40
        $region39: #{tpu_custom_call.1} parent=31 // pred_region
          %228 = dma.done %s221, 1024
        $region40: #{tpu_custom_call.1} parent=31 // pred_fallthru
          _
        %s229 = sand.u32 %s23, 1
        %s230 = scalar_lea.sflag [#allocation6], %s229
        %s231 = sand.u32 %s83, 1
        %s232 = smul.addr %s231, 64
        %s233 = scalar_lea.vmem [#allocation7], %s232
        // Predicated region
        $region41: #{tpu_custom_call.1} parent=31 // pred_check
          %p234 = pneg %p96
        $region42: #{tpu_custom_call.1} parent=31 // pred_check_branch
          %236 = sbr.rel (%p234) target = $region44
        $region43: #{tpu_custom_call.1} parent=31 // pred_region
          %237 = dma.done %s230, 1024
        $region44: #{tpu_custom_call.1} parent=31 // pred_fallthru
          _
        %s238 = sand.u32 %s31, 1
        %s239 = scalar_lea.sflag [#allocation3], %s238
        %s240 = sand.u32 %s31, 1
        %s241 = smul.addr %s240, 64
        %s242 = scalar_lea.vmem [#allocation2], %s241
        %p243 = pneg %p44
        %p244 = pneg %p41
        %s245 = sand.u32 %s23, 1
        %s246 = scalar_lea.sflag [#allocation6], %s245
        %s247 = sand.u32 %s57, 1
        %s248 = smul.addr %s247, 64
        %s249 = scalar_lea.vmem [#allocation5], %s248
        %p250 = pneg %p70
        %p251 = pneg %p67
        %s252 = sand.u32 %s23, 1
        %s253 = scalar_lea.sflag [#allocation6], %s252
        %s254 = sand.u32 %s83, 1
        %s255 = smul.addr %s254, 64
        %s256 = scalar_lea.vmem [#allocation7], %s255
        %p257 = pneg %p96
        %p258 = pneg %p93
        %p259 = pneg %p122
        %p260 = pneg %p119
        %s261 = sand.u32 %s109, 1
        %s262 = scalar_lea.sflag [#allocation4], %s261
        %s263 = sand.u32 %s109, 1
        %s264 = smul.addr %s263, 64
        %s265 = scalar_lea.vmem [#allocation8], %s264
        %v266 = vld [vmem:[%s215] sm:$0xff]
        %v267 = vld [vmem:[%s215 + $0x8] sm:$0xff]
        %v268 = vld [vmem:[%s215 + $0x10] sm:$0xff]
        %v269 = vld [vmem:[%s215 + $0x18] sm:$0xff]
        %v270 = vld [vmem:[%s215 + $0x20] sm:$0xff]
        %v271 = vld [vmem:[%s215 + $0x28] sm:$0xff]
        %v272 = vld [vmem:[%s215 + $0x30] sm:$0xff]
        %v273 = vld [vmem:[%s215 + $0x38] sm:$0xff]
        %v274 = vld [vmem:[%s224] sm:$0xff]
        %v275 = vld [vmem:[%s224 + $0x8] sm:$0xff]
        %v276 = vld [vmem:[%s224 + $0x10] sm:$0xff]
        %v277 = vld [vmem:[%s224 + $0x18] sm:$0xff]
        %v278 = vld [vmem:[%s224 + $0x20] sm:$0xff]
        %v279 = vld [vmem:[%s224 + $0x28] sm:$0xff]
        %v280 = vld [vmem:[%s224 + $0x30] sm:$0xff]
        %v281 = vld [vmem:[%s224 + $0x38] sm:$0xff]
        %282 = vmatprep.subr.mxu0 0.0
        %283 = vmatpush1.xpose.msra.mxu0 0.0
        %284 = vmatprep.subr.mxu0 0.0
        %285 = vmatpush1.xpose.msra.mxu0 0.0
        %286 = vmatprep.subr.mxu0 0.0
        %287 = vmatpush1.xpose.msra.mxu0 0.0
        %288 = vmatprep.subr.mxu0 0.0
        %289 = vmatpush1.xpose.msra.mxu0 0.0
        %290 = vmatprep.subr.mxu0 0.0
        %291 = vmatpush1.xpose.msra.mxu0 0.0
        %292 = vmatprep.subr.mxu0 0.0
        %293 = vmatpush1.xpose.msra.mxu0 0.0
        %294 = vmatprep.subr.mxu0 0.0
        %295 = vmatpush1.xpose.msra.mxu0 0.0
        %296 = vmatprep.subr.mxu0 0.0
        %297 = vmatpush1.xpose.msra.mxu0 0.0
        %298 = vmatprep.subr.mxu0 0.0
        %299 = vmatpush1.xpose.msra.mxu0 0.0
        %300 = vmatprep.subr.mxu0 0.0
        %301 = vmatpush1.xpose.msra.mxu0 0.0
        %302 = vmatprep.subr.mxu0 0.0
        %303 = vmatpush1.xpose.msra.mxu0 0.0
        %304 = vmatprep.subr.mxu0 0.0
        %305 = vmatpush1.xpose.msra.mxu0 0.0
        %306 = vmatprep.subr.mxu0 0.0
        %307 = vmatpush1.xpose.msra.mxu0 0.0
        %308 = vmatprep.subr.mxu0 0.0
        %309 = vmatpush1.xpose.msra.mxu0 0.0
        %310 = vmatprep.subr.mxu0 0.0
        %311 = vmatpush1.xpose.msra.mxu0 0.0
        %312 = vmatprep.subr.mxu0 %v275
        %313 = vmatpush1.xpose.msra.mxu0 %v274
        %314 = vmatprep.subr.mxu0 0.0
        %315 = vmatpush2.xpose.msra.mxu0 0.0
        %316 = vmatprep.subr.mxu0 0.0
        %317 = vmatpush2.xpose.msra.mxu0 0.0
        %318 = vmatprep.subr.mxu0 0.0
        %319 = vmatpush2.xpose.msra.mxu0 0.0
        %320 = vmatprep.subr.mxu0 0.0
        %321 = vmatpush2.xpose.msra.mxu0 0.0
        %322 = vmatprep.subr.mxu0 0.0
        %323 = vmatpush2.xpose.msra.mxu0 0.0
        %324 = vmatprep.subr.mxu0 0.0
        %325 = vmatpush2.xpose.msra.mxu0 0.0
        %326 = vmatprep.subr.mxu0 0.0
        %327 = vmatpush2.xpose.msra.mxu0 0.0
        %328 = vmatprep.subr.mxu0 0.0
        %329 = vmatpush2.xpose.msra.mxu0 0.0
        %330 = vmatprep.subr.mxu0 0.0
        %331 = vmatpush2.xpose.msra.mxu0 0.0
        %332 = vmatprep.subr.mxu0 0.0
        %333 = vmatpush2.xpose.msra.mxu0 0.0
        %334 = vmatprep.subr.mxu0 0.0
        %335 = vmatpush2.xpose.msra.mxu0 0.0
        %336 = vmatprep.subr.mxu0 0.0
        %337 = vmatpush2.xpose.msra.mxu0 0.0
        %338 = vmatprep.subr.mxu0 0.0
        %339 = vmatpush2.xpose.msra.mxu0 0.0
        %340 = vmatprep.subr.mxu0 0.0
        %341 = vmatpush2.xpose.msra.mxu0 0.0
        %342 = vmatprep.subr.mxu0 0.0
        %343 = vmatpush2.xpose.msra.mxu0 0.0
        %344 = vmatprep.subr.mxu0 0.0
        %345 = vmatpush2.xpose.msra.mxu0 0.0
        %346 = vmatprep.mubr.f32.mxu0 %v267
        %347 = vmatmul.mubr.f32.gmra.mxu0 %v266
        %v348 = vpop.f32.mrf.mxu0
        %v349 = vadd.f32 0.0, %v348
        %v350 = vpop.f32.mrf.mxu0
        %351 = vdwg.mxu0
        %352 = vmatprep.subr.mxu0 0.0
        %353 = vmatpush1.xpose.msra.mxu0 0.0
        %354 = vmatprep.subr.mxu0 0.0
        %355 = vmatpush1.xpose.msra.mxu0 0.0
        %356 = vmatprep.subr.mxu0 0.0
        %357 = vmatpush1.xpose.msra.mxu0 0.0
        %358 = vmatprep.subr.mxu0 0.0
        %359 = vmatpush1.xpose.msra.mxu0 0.0
        %360 = vmatprep.subr.mxu0 0.0
        %361 = vmatpush1.xpose.msra.mxu0 0.0
        %362 = vmatprep.subr.mxu0 0.0
        %363 = vmatpush1.xpose.msra.mxu0 0.0
        %364 = vmatprep.subr.mxu0 0.0
        %365 = vmatpush1.xpose.msra.mxu0 0.0
        %366 = vmatprep.subr.mxu0 0.0
        %367 = vmatpush1.xpose.msra.mxu0 0.0
        %368 = vmatprep.subr.mxu0 0.0
        %369 = vmatpush1.xpose.msra.mxu0 0.0
        %370 = vmatprep.subr.mxu0 0.0
        %371 = vmatpush1.xpose.msra.mxu0 0.0
        %372 = vmatprep.subr.mxu0 0.0
        %373 = vmatpush1.xpose.msra.mxu0 0.0
        %374 = vmatprep.subr.mxu0 0.0
        %375 = vmatpush1.xpose.msra.mxu0 0.0
        %376 = vmatprep.subr.mxu0 0.0
        %377 = vmatpush1.xpose.msra.mxu0 0.0
        %378 = vmatprep.subr.mxu0 0.0
        %379 = vmatpush1.xpose.msra.mxu0 0.0
        %380 = vmatprep.subr.mxu0 0.0
        %381 = vmatpush1.xpose.msra.mxu0 0.0
        %382 = vmatprep.subr.mxu0 %v277
        %383 = vmatpush1.xpose.msra.mxu0 %v276
        %384 = vmatprep.subr.mxu0 0.0
        %385 = vmatpush2.xpose.msra.mxu0 0.0
        %386 = vmatprep.subr.mxu0 0.0
        %387 = vmatpush2.xpose.msra.mxu0 0.0
        %388 = vmatprep.subr.mxu0 0.0
        %389 = vmatpush2.xpose.msra.mxu0 0.0
        %390 = vmatprep.subr.mxu0 0.0
        %391 = vmatpush2.xpose.msra.mxu0 0.0
        %392 = vmatprep.subr.mxu0 0.0
        %393 = vmatpush2.xpose.msra.mxu0 0.0
        %394 = vmatprep.subr.mxu0 0.0
        %395 = vmatpush2.xpose.msra.mxu0 0.0
        %396 = vmatprep.subr.mxu0 0.0
        %397 = vmatpush2.xpose.msra.mxu0 0.0
        %398 = vmatprep.subr.mxu0 0.0
        %399 = vmatpush2.xpose.msra.mxu0 0.0
        %400 = vmatprep.subr.mxu0 0.0
        %401 = vmatpush2.xpose.msra.mxu0 0.0
        %402 = vmatprep.subr.mxu0 0.0
        %403 = vmatpush2.xpose.msra.mxu0 0.0
        %404 = vmatprep.subr.mxu0 0.0
        %405 = vmatpush2.xpose.msra.mxu0 0.0
        %406 = vmatprep.subr.mxu0 0.0
        %407 = vmatpush2.xpose.msra.mxu0 0.0
        %408 = vmatprep.subr.mxu0 0.0
        %409 = vmatpush2.xpose.msra.mxu0 0.0
        %410 = vmatprep.subr.mxu0 0.0
        %411 = vmatpush2.xpose.msra.mxu0 0.0
        %412 = vmatprep.subr.mxu0 0.0
        %413 = vmatpush2.xpose.msra.mxu0 0.0
        %414 = vmatprep.subr.mxu0 0.0
        %415 = vmatpush2.xpose.msra.mxu0 0.0
        %416 = vmatprep.mubr.f32.mxu0 %v269
        %417 = vmatmul.mubr.f32.gmra.mxu0 %v268
        %v418 = vpop.f32.mrf.mxu0
        %v419 = vadd.f32 0.0, %v418
        %v420 = vpop.f32.mrf.mxu0
        %421 = vdwg.mxu0
        %422 = vmatprep.subr.mxu0 0.0
        %423 = vmatpush1.xpose.msra.mxu0 0.0
        %424 = vmatprep.subr.mxu0 0.0
        %425 = vmatpush1.xpose.msra.mxu0 0.0
        %426 = vmatprep.subr.mxu0 0.0
        %427 = vmatpush1.xpose.msra.mxu0 0.0
        %428 = vmatprep.subr.mxu0 0.0
        %429 = vmatpush1.xpose.msra.mxu0 0.0
        %430 = vmatprep.subr.mxu0 0.0
        %431 = vmatpush1.xpose.msra.mxu0 0.0
        %432 = vmatprep.subr.mxu0 0.0
        %433 = vmatpush1.xpose.msra.mxu0 0.0
        %434 = vmatprep.subr.mxu0 0.0
        %435 = vmatpush1.xpose.msra.mxu0 0.0
        %436 = vmatprep.subr.mxu0 0.0
        %437 = vmatpush1.xpose.msra.mxu0 0.0
        %438 = vmatprep.subr.mxu0 0.0
        %439 = vmatpush1.xpose.msra.mxu0 0.0
        %440 = vmatprep.subr.mxu0 0.0
        %441 = vmatpush1.xpose.msra.mxu0 0.0
        %442 = vmatprep.subr.mxu0 0.0
        %443 = vmatpush1.xpose.msra.mxu0 0.0
        %444 = vmatprep.subr.mxu0 0.0
        %445 = vmatpush1.xpose.msra.mxu0 0.0
        %446 = vmatprep.subr.mxu0 0.0
        %447 = vmatpush1.xpose.msra.mxu0 0.0
        %448 = vmatprep.subr.mxu0 0.0
        %449 = vmatpush1.xpose.msra.mxu0 0.0
        %450 = vmatprep.subr.mxu0 0.0
        %451 = vmatpush1.xpose.msra.mxu0 0.0
        %452 = vmatprep.subr.mxu0 %v279
        %453 = vmatpush1.xpose.msra.mxu0 %v278
        %454 = vmatprep.subr.mxu0 0.0
        %455 = vmatpush2.xpose.msra.mxu0 0.0
        %456 = vmatprep.subr.mxu0 0.0
        %457 = vmatpush2.xpose.msra.mxu0 0.0
        %458 = vmatprep.subr.mxu0 0.0
        %459 = vmatpush2.xpose.msra.mxu0 0.0
        %460 = vmatprep.subr.mxu0 0.0
        %461 = vmatpush2.xpose.msra.mxu0 0.0
        %462 = vmatprep.subr.mxu0 0.0
        %463 = vmatpush2.xpose.msra.mxu0 0.0
        %464 = vmatprep.subr.mxu0 0.0
        %465 = vmatpush2.xpose.msra.mxu0 0.0
        %466 = vmatprep.subr.mxu0 0.0
        %467 = vmatpush2.xpose.msra.mxu0 0.0
        %468 = vmatprep.subr.mxu0 0.0
        %469 = vmatpush2.xpose.msra.mxu0 0.0
        %470 = vmatprep.subr.mxu0 0.0
        %471 = vmatpush2.xpose.msra.mxu0 0.0
        %472 = vmatprep.subr.mxu0 0.0
        %473 = vmatpush2.xpose.msra.mxu0 0.0
        %474 = vmatprep.subr.mxu0 0.0
        %475 = vmatpush2.xpose.msra.mxu0 0.0
        %476 = vmatprep.subr.mxu0 0.0
        %477 = vmatpush2.xpose.msra.mxu0 0.0
        %478 = vmatprep.subr.mxu0 0.0
        %479 = vmatpush2.xpose.msra.mxu0 0.0
        %480 = vmatprep.subr.mxu0 0.0
        %481 = vmatpush2.xpose.msra.mxu0 0.0
        %482 = vmatprep.subr.mxu0 0.0
        %483 = vmatpush2.xpose.msra.mxu0 0.0
        %484 = vmatprep.subr.mxu0 0.0
        %485 = vmatpush2.xpose.msra.mxu0 0.0
        %486 = vmatprep.mubr.f32.mxu0 %v271
        %487 = vmatmul.mubr.f32.gmra.mxu0 %v270
        %v488 = vpop.f32.mrf.mxu0
        %v489 = vadd.f32 0.0, %v488
        %v490 = vpop.f32.mrf.mxu0
        %491 = vdwg.mxu0
        %492 = vmatprep.subr.mxu0 0.0
        %493 = vmatpush1.xpose.msra.mxu0 0.0
        %494 = vmatprep.subr.mxu0 0.0
        %495 = vmatpush1.xpose.msra.mxu0 0.0
        %496 = vmatprep.subr.mxu0 0.0
        %497 = vmatpush1.xpose.msra.mxu0 0.0
        %498 = vmatprep.subr.mxu0 0.0
        %499 = vmatpush1.xpose.msra.mxu0 0.0
        %500 = vmatprep.subr.mxu0 0.0
        %501 = vmatpush1.xpose.msra.mxu0 0.0
        %502 = vmatprep.subr.mxu0 0.0
        %503 = vmatpush1.xpose.msra.mxu0 0.0
        %504 = vmatprep.subr.mxu0 0.0
        %505 = vmatpush1.xpose.msra.mxu0 0.0
        %506 = vmatprep.subr.mxu0 0.0
        %507 = vmatpush1.xpose.msra.mxu0 0.0
        %508 = vmatprep.subr.mxu0 0.0
        %509 = vmatpush1.xpose.msra.mxu0 0.0
        %510 = vmatprep.subr.mxu0 0.0
        %511 = vmatpush1.xpose.msra.mxu0 0.0
        %512 = vmatprep.subr.mxu0 0.0
        %513 = vmatpush1.xpose.msra.mxu0 0.0
        %514 = vmatprep.subr.mxu0 0.0
        %515 = vmatpush1.xpose.msra.mxu0 0.0
        %516 = vmatprep.subr.mxu0 0.0
        %517 = vmatpush1.xpose.msra.mxu0 0.0
        %518 = vmatprep.subr.mxu0 0.0
        %519 = vmatpush1.xpose.msra.mxu0 0.0
        %520 = vmatprep.subr.mxu0 0.0
        %521 = vmatpush1.xpose.msra.mxu0 0.0
        %522 = vmatprep.subr.mxu0 %v281
        %523 = vmatpush1.xpose.msra.mxu0 %v280
        %524 = vmatprep.subr.mxu0 0.0
        %525 = vmatpush2.xpose.msra.mxu0 0.0
        %526 = vmatprep.subr.mxu0 0.0
        %527 = vmatpush2.xpose.msra.mxu0 0.0
        %528 = vmatprep.subr.mxu0 0.0
        %529 = vmatpush2.xpose.msra.mxu0 0.0
        %530 = vmatprep.subr.mxu0 0.0
        %531 = vmatpush2.xpose.msra.mxu0 0.0
        %532 = vmatprep.subr.mxu0 0.0
        %533 = vmatpush2.xpose.msra.mxu0 0.0
        %534 = vmatprep.subr.mxu0 0.0
        %535 = vmatpush2.xpose.msra.mxu0 0.0
        %536 = vmatprep.subr.mxu0 0.0
        %537 = vmatpush2.xpose.msra.mxu0 0.0
        %538 = vmatprep.subr.mxu0 0.0
        %539 = vmatpush2.xpose.msra.mxu0 0.0
        %540 = vmatprep.subr.mxu0 0.0
        %541 = vmatpush2.xpose.msra.mxu0 0.0
        %542 = vmatprep.subr.mxu0 0.0
        %543 = vmatpush2.xpose.msra.mxu0 0.0
        %544 = vmatprep.subr.mxu0 0.0
        %545 = vmatpush2.xpose.msra.mxu0 0.0
        %546 = vmatprep.subr.mxu0 0.0
        %547 = vmatpush2.xpose.msra.mxu0 0.0
        %548 = vmatprep.subr.mxu0 0.0
        %549 = vmatpush2.xpose.msra.mxu0 0.0
        %550 = vmatprep.subr.mxu0 0.0
        %551 = vmatpush2.xpose.msra.mxu0 0.0
        %552 = vmatprep.subr.mxu0 0.0
        %553 = vmatpush2.xpose.msra.mxu0 0.0
        %554 = vmatprep.subr.mxu0 0.0
        %555 = vmatpush2.xpose.msra.mxu0 0.0
        %556 = vmatprep.mubr.f32.mxu0 %v273
        %557 = vmatmul.mubr.f32.gmra.mxu0 %v272
        %v558 = vpop.f32.mrf.mxu0
        %v559 = vadd.f32 0.0, %v558
        %v560 = vpop.f32.mrf.mxu0
        %561 = vdwg.mxu0
        %vm562 = vcmask 64512
        %v563 = vsel %vm562, %v349, 0.0
        %v564 = vsel %vm562, %v419, 0.0
        %v565 = vadd.f32 %v563, %v564
        %v566 = vsel %vm562, %v489, 0.0
        %v567 = vadd.f32 %v565, %v566
        %v568 = vsel %vm562, %v559, 0.0
        %v569 = vadd.f32 %v567, %v568
        %v570 = vsel %vm562, %v569, -inf
        %571 = vmax.xlane.f32.xlu0 %v570
        %v572 = vpop.xlane.xlu0 %571
        %v573 = vsub.f32 %v569, %v572
        %v574 = vmul.f32 %v573, 1.442695
        %v575 = vpow.pop %v574
        %v576 = vsel %vm562, %v575, 0.0
        %577 = vadd.xlane.f32.xlu0 %v576
        %v578 = vpop.xlane.xlu0 %577
        %v579 = vrcp.pop %v578
        %v580 = vmul.f32 %v575, %v579
        %v581 = vld [vmem:[%s233] sm:$0xff]
        %v582 = vld [vmem:[%s233 + $0x8] sm:$0xff]
        %v583 = vld [vmem:[%s233 + $0x10] sm:$0xff]
        %v584 = vld [vmem:[%s233 + $0x18] sm:$0xff]
        %v585 = vld [vmem:[%s233 + $0x20] sm:$0xff]
        %v586 = vld [vmem:[%s233 + $0x28] sm:$0xff]
        %v587 = vld [vmem:[%s233 + $0x30] sm:$0xff]
        %v588 = vld [vmem:[%s233 + $0x38] sm:$0xff]
        %v590 = vsel %vm562, %v580, 0
        %592 = vmatprep.subr.mxu0 0.0
        %593 = vmatpush1.msra.mxu0 0.0
        %594 = vmatprep.subr.mxu0 0.0
        %595 = vmatpush1.msra.mxu0 0.0
        %596 = vmatprep.subr.mxu0 0.0
        %597 = vmatpush1.msra.mxu0 0.0
        %598 = vmatprep.subr.mxu0 0.0
        %599 = vmatpush1.msra.mxu0 0.0
        %600 = vmatprep.subr.mxu0 0.0
        %601 = vmatpush1.msra.mxu0 0.0
        %602 = vmatprep.subr.mxu0 0.0
        %603 = vmatpush1.msra.mxu0 0.0
        %604 = vmatprep.subr.mxu0 0.0
        %605 = vmatpush1.msra.mxu0 0.0
        %606 = vmatprep.subr.mxu0 0.0
        %607 = vmatpush1.msra.mxu0 0.0
        %608 = vmatprep.subr.mxu0 0.0
        %609 = vmatpush1.msra.mxu0 0.0
        %610 = vmatprep.subr.mxu0 0.0
        %611 = vmatpush1.msra.mxu0 0.0
        %612 = vmatprep.subr.mxu0 0.0
        %613 = vmatpush1.msra.mxu0 0.0
        %614 = vmatprep.subr.mxu0 0.0
        %615 = vmatpush1.msra.mxu0 0.0
        %616 = vmatprep.subr.mxu0 0.0
        %617 = vmatpush1.msra.mxu0 0.0
        %618 = vmatprep.subr.mxu0 0.0
        %619 = vmatpush1.msra.mxu0 0.0
        %620 = vmatprep.subr.mxu0 0.0
        %621 = vmatpush1.msra.mxu0 0.0
        %622 = vmatprep.subr.mxu0 %v582
        %623 = vmatpush1.msra.mxu0 %v581
        %624 = vmatprep.subr.mxu0 0.0
        %625 = vmatpush2.msra.mxu0 0.0
        %626 = vmatprep.subr.mxu0 0.0
        %627 = vmatpush2.msra.mxu0 0.0
        %628 = vmatprep.subr.mxu0 0.0
        %629 = vmatpush2.msra.mxu0 0.0
        %630 = vmatprep.subr.mxu0 0.0
        %631 = vmatpush2.msra.mxu0 0.0
        %632 = vmatprep.subr.mxu0 0.0
        %633 = vmatpush2.msra.mxu0 0.0
        %634 = vmatprep.subr.mxu0 0.0
        %635 = vmatpush2.msra.mxu0 0.0
        %636 = vmatprep.subr.mxu0 0.0
        %637 = vmatpush2.msra.mxu0 0.0
        %638 = vmatprep.subr.mxu0 0.0
        %639 = vmatpush2.msra.mxu0 0.0
        %640 = vmatprep.subr.mxu0 0.0
        %641 = vmatpush2.msra.mxu0 0.0
        %642 = vmatprep.subr.mxu0 0.0
        %643 = vmatpush2.msra.mxu0 0.0
        %644 = vmatprep.subr.mxu0 0.0
        %645 = vmatpush2.msra.mxu0 0.0
        %646 = vmatprep.subr.mxu0 0.0
        %647 = vmatpush2.msra.mxu0 0.0
        %648 = vmatprep.subr.mxu0 0.0
        %649 = vmatpush2.msra.mxu0 0.0
        %650 = vmatprep.subr.mxu0 0.0
        %651 = vmatpush2.msra.mxu0 0.0
        %652 = vmatprep.subr.mxu0 0.0
        %653 = vmatpush2.msra.mxu0 0.0
        %654 = vmatprep.subr.mxu0 0.0
        %655 = vmatpush2.msra.mxu0 0.0
        %656 = vmatprep.mubr.f32.mxu0 0.0
        %657 = vmatmul.mubr.f32.gmra.mxu0 %v590
        %v658 = vpop.f32.mrf.mxu0
        %v659 = vadd.f32 0.0, %v658
        %v660 = vpop.f32.mrf.mxu0
        %v661 = vadd.f32 0.0, %v660
        %662 = vdwg.mxu0
        %663 = vmatprep.subr.mxu0 0.0
        %664 = vmatpush1.msra.mxu0 0.0
        %665 = vmatprep.subr.mxu0 0.0
        %666 = vmatpush1.msra.mxu0 0.0
        %667 = vmatprep.subr.mxu0 0.0
        %668 = vmatpush1.msra.mxu0 0.0
        %669 = vmatprep.subr.mxu0 0.0
        %670 = vmatpush1.msra.mxu0 0.0
        %671 = vmatprep.subr.mxu0 0.0
        %672 = vmatpush1.msra.mxu0 0.0
        %673 = vmatprep.subr.mxu0 0.0
        %674 = vmatpush1.msra.mxu0 0.0
        %675 = vmatprep.subr.mxu0 0.0
        %676 = vmatpush1.msra.mxu0 0.0
        %677 = vmatprep.subr.mxu0 0.0
        %678 = vmatpush1.msra.mxu0 0.0
        %679 = vmatprep.subr.mxu0 0.0
        %680 = vmatpush1.msra.mxu0 0.0
        %681 = vmatprep.subr.mxu0 0.0
        %682 = vmatpush1.msra.mxu0 0.0
        %683 = vmatprep.subr.mxu0 0.0
        %684 = vmatpush1.msra.mxu0 0.0
        %685 = vmatprep.subr.mxu0 0.0
        %686 = vmatpush1.msra.mxu0 0.0
        %687 = vmatprep.subr.mxu0 0.0
        %688 = vmatpush1.msra.mxu0 0.0
        %689 = vmatprep.subr.mxu0 0.0
        %690 = vmatpush1.msra.mxu0 0.0
        %691 = vmatprep.subr.mxu0 0.0
        %692 = vmatpush1.msra.mxu0 0.0
        %693 = vmatprep.subr.mxu0 %v584
        %694 = vmatpush1.msra.mxu0 %v583
        %695 = vmatprep.subr.mxu0 0.0
        %696 = vmatpush2.msra.mxu0 0.0
        %697 = vmatprep.subr.mxu0 0.0
        %698 = vmatpush2.msra.mxu0 0.0
        %699 = vmatprep.subr.mxu0 0.0
        %700 = vmatpush2.msra.mxu0 0.0
        %701 = vmatprep.subr.mxu0 0.0
        %702 = vmatpush2.msra.mxu0 0.0
        %703 = vmatprep.subr.mxu0 0.0
        %704 = vmatpush2.msra.mxu0 0.0
        %705 = vmatprep.subr.mxu0 0.0
        %706 = vmatpush2.msra.mxu0 0.0
        %707 = vmatprep.subr.mxu0 0.0
        %708 = vmatpush2.msra.mxu0 0.0
        %709 = vmatprep.subr.mxu0 0.0
        %710 = vmatpush2.msra.mxu0 0.0
        %711 = vmatprep.subr.mxu0 0.0
        %712 = vmatpush2.msra.mxu0 0.0
        %713 = vmatprep.subr.mxu0 0.0
        %714 = vmatpush2.msra.mxu0 0.0
        %715 = vmatprep.subr.mxu0 0.0
        %716 = vmatpush2.msra.mxu0 0.0
        %717 = vmatprep.subr.mxu0 0.0
        %718 = vmatpush2.msra.mxu0 0.0
        %719 = vmatprep.subr.mxu0 0.0
        %720 = vmatpush2.msra.mxu0 0.0
        %721 = vmatprep.subr.mxu0 0.0
        %722 = vmatpush2.msra.mxu0 0.0
        %723 = vmatprep.subr.mxu0 0.0
        %724 = vmatpush2.msra.mxu0 0.0
        %725 = vmatprep.subr.mxu0 0.0
        %726 = vmatpush2.msra.mxu0 0.0
        %727 = vmatprep.mubr.f32.mxu0 0.0
        %728 = vmatmul.mubr.f32.gmra.mxu0 %v590
        %v729 = vpop.f32.mrf.mxu0
        %v730 = vadd.f32 0.0, %v729
        %v731 = vpop.f32.mrf.mxu0
        %v732 = vadd.f32 0.0, %v731
        %733 = vdwg.mxu0
        %734 = vmatprep.subr.mxu0 0.0
        %735 = vmatpush1.msra.mxu0 0.0
        %736 = vmatprep.subr.mxu0 0.0
        %737 = vmatpush1.msra.mxu0 0.0
        %738 = vmatprep.subr.mxu0 0.0
        %739 = vmatpush1.msra.mxu0 0.0
        %740 = vmatprep.subr.mxu0 0.0
        %741 = vmatpush1.msra.mxu0 0.0
        %742 = vmatprep.subr.mxu0 0.0
        %743 = vmatpush1.msra.mxu0 0.0
        %744 = vmatprep.subr.mxu0 0.0
        %745 = vmatpush1.msra.mxu0 0.0
        %746 = vmatprep.subr.mxu0 0.0
        %747 = vmatpush1.msra.mxu0 0.0
        %748 = vmatprep.subr.mxu0 0.0
        %749 = vmatpush1.msra.mxu0 0.0
        %750 = vmatprep.subr.mxu0 0.0
        %751 = vmatpush1.msra.mxu0 0.0
        %752 = vmatprep.subr.mxu0 0.0
        %753 = vmatpush1.msra.mxu0 0.0
        %754 = vmatprep.subr.mxu0 0.0
        %755 = vmatpush1.msra.mxu0 0.0
        %756 = vmatprep.subr.mxu0 0.0
        %757 = vmatpush1.msra.mxu0 0.0
        %758 = vmatprep.subr.mxu0 0.0
        %759 = vmatpush1.msra.mxu0 0.0
        %760 = vmatprep.subr.mxu0 0.0
        %761 = vmatpush1.msra.mxu0 0.0
        %762 = vmatprep.subr.mxu0 0.0
        %763 = vmatpush1.msra.mxu0 0.0
        %764 = vmatprep.subr.mxu0 %v586
        %765 = vmatpush1.msra.mxu0 %v585
        %766 = vmatprep.subr.mxu0 0.0
        %767 = vmatpush2.msra.mxu0 0.0
        %768 = vmatprep.subr.mxu0 0.0
        %769 = vmatpush2.msra.mxu0 0.0
        %770 = vmatprep.subr.mxu0 0.0
        %771 = vmatpush2.msra.mxu0 0.0
        %772 = vmatprep.subr.mxu0 0.0
        %773 = vmatpush2.msra.mxu0 0.0
        %774 = vmatprep.subr.mxu0 0.0
        %775 = vmatpush2.msra.mxu0 0.0
        %776 = vmatprep.subr.mxu0 0.0
        %777 = vmatpush2.msra.mxu0 0.0
        %778 = vmatprep.subr.mxu0 0.0
        %779 = vmatpush2.msra.mxu0 0.0
        %780 = vmatprep.subr.mxu0 0.0
        %781 = vmatpush2.msra.mxu0 0.0
        %782 = vmatprep.subr.mxu0 0.0
        %783 = vmatpush2.msra.mxu0 0.0
        %784 = vmatprep.subr.mxu0 0.0
        %785 = vmatpush2.msra.mxu0 0.0
        %786 = vmatprep.subr.mxu0 0.0
        %787 = vmatpush2.msra.mxu0 0.0
        %788 = vmatprep.subr.mxu0 0.0
        %789 = vmatpush2.msra.mxu0 0.0
        %790 = vmatprep.subr.mxu0 0.0
        %791 = vmatpush2.msra.mxu0 0.0
        %792 = vmatprep.subr.mxu0 0.0
        %793 = vmatpush2.msra.mxu0 0.0
        %794 = vmatprep.subr.mxu0 0.0
        %795 = vmatpush2.msra.mxu0 0.0
        %796 = vmatprep.subr.mxu0 0.0
        %797 = vmatpush2.msra.mxu0 0.0
        %798 = vmatprep.mubr.f32.mxu0 0.0
        %799 = vmatmul.mubr.f32.gmra.mxu0 %v590
        %v800 = vpop.f32.mrf.mxu0
        %v801 = vadd.f32 0.0, %v800
        %v802 = vpop.f32.mrf.mxu0
        %v803 = vadd.f32 0.0, %v802
        %804 = vdwg.mxu0
        %805 = vmatprep.subr.mxu0 0.0
        %806 = vmatpush1.msra.mxu0 0.0
        %807 = vmatprep.subr.mxu0 0.0
        %808 = vmatpush1.msra.mxu0 0.0
        %809 = vmatprep.subr.mxu0 0.0
        %810 = vmatpush1.msra.mxu0 0.0
        %811 = vmatprep.subr.mxu0 0.0
        %812 = vmatpush1.msra.mxu0 0.0
        %813 = vmatprep.subr.mxu0 0.0
        %814 = vmatpush1.msra.mxu0 0.0
        %815 = vmatprep.subr.mxu0 0.0
        %816 = vmatpush1.msra.mxu0 0.0
        %817 = vmatprep.subr.mxu0 0.0
        %818 = vmatpush1.msra.mxu0 0.0
        %819 = vmatprep.subr.mxu0 0.0
        %820 = vmatpush1.msra.mxu0 0.0
        %821 = vmatprep.subr.mxu0 0.0
        %822 = vmatpush1.msra.mxu0 0.0
        %823 = vmatprep.subr.mxu0 0.0
        %824 = vmatpush1.msra.mxu0 0.0
        %825 = vmatprep.subr.mxu0 0.0
        %826 = vmatpush1.msra.mxu0 0.0
        %827 = vmatprep.subr.mxu0 0.0
        %828 = vmatpush1.msra.mxu0 0.0
        %829 = vmatprep.subr.mxu0 0.0
        %830 = vmatpush1.msra.mxu0 0.0
        %831 = vmatprep.subr.mxu0 0.0
        %832 = vmatpush1.msra.mxu0 0.0
        %833 = vmatprep.subr.mxu0 0.0
        %834 = vmatpush1.msra.mxu0 0.0
        %835 = vmatprep.subr.mxu0 %v588
        %836 = vmatpush1.msra.mxu0 %v587
        %837 = vmatprep.subr.mxu0 0.0
        %838 = vmatpush2.msra.mxu0 0.0
        %839 = vmatprep.subr.mxu0 0.0
        %840 = vmatpush2.msra.mxu0 0.0
        %841 = vmatprep.subr.mxu0 0.0
        %842 = vmatpush2.msra.mxu0 0.0
        %843 = vmatprep.subr.mxu0 0.0
        %844 = vmatpush2.msra.mxu0 0.0
        %845 = vmatprep.subr.mxu0 0.0
        %846 = vmatpush2.msra.mxu0 0.0
        %847 = vmatprep.subr.mxu0 0.0
        %848 = vmatpush2.msra.mxu0 0.0
        %849 = vmatprep.subr.mxu0 0.0
        %850 = vmatpush2.msra.mxu0 0.0
        %851 = vmatprep.subr.mxu0 0.0
        %852 = vmatpush2.msra.mxu0 0.0
        %853 = vmatprep.subr.mxu0 0.0
        %854 = vmatpush2.msra.mxu0 0.0
        %855 = vmatprep.subr.mxu0 0.0
        %856 = vmatpush2.msra.mxu0 0.0
        %857 = vmatprep.subr.mxu0 0.0
        %858 = vmatpush2.msra.mxu0 0.0
        %859 = vmatprep.subr.mxu0 0.0
        %860 = vmatpush2.msra.mxu0 0.0
        %861 = vmatprep.subr.mxu0 0.0
        %862 = vmatpush2.msra.mxu0 0.0
        %863 = vmatprep.subr.mxu0 0.0
        %864 = vmatpush2.msra.mxu0 0.0
        %865 = vmatprep.subr.mxu0 0.0
        %866 = vmatpush2.msra.mxu0 0.0
        %867 = vmatprep.subr.mxu0 0.0
        %868 = vmatpush2.msra.mxu0 0.0
        %869 = vmatprep.mubr.f32.mxu0 0.0
        %870 = vmatmul.mubr.f32.gmra.mxu0 %v590
        %v871 = vpop.f32.mrf.mxu0
        %v872 = vadd.f32 0.0, %v871
        %v873 = vpop.f32.mrf.mxu0
        %v874 = vadd.f32 0.0, %v873
        %875 = vdwg.mxu0
        %876 = vst [vmem:[%s265] sm:$0xff] %v659
        %877 = vst [vmem:[%s265 + $0x8] sm:$0xff] %v661
        %878 = vst [vmem:[%s265 + $0x10] sm:$0xff] %v730
        %879 = vst [vmem:[%s265 + $0x18] sm:$0xff] %v732
        %880 = vst [vmem:[%s265 + $0x20] sm:$0xff] %v801
        %881 = vst [vmem:[%s265 + $0x28] sm:$0xff] %v803
        %882 = vst [vmem:[%s265 + $0x30] sm:$0xff] %v872
        %883 = vst [vmem:[%s265 + $0x38] sm:$0xff] %v874
        %s884 = sand.u32 %s109, 1
        %s885 = scalar_lea.sflag [#allocation4], %s884
        %s886 = sand.u32 %s109, 1
        %s887 = smul.addr %s886, 64
        %s888 = scalar_lea.vmem [#allocation8], %s887
        // Predicated region
        $region45: #{tpu_custom_call.1} parent=31 // pred_check
          %p889 = pneg %p119
        $region46: #{tpu_custom_call.1} parent=31 // pred_check_branch
          %891 = sbr.rel (%p889) target = $region48
        $region47: #{tpu_custom_call.1} parent=31 // pred_region
          %s893 = ssub.s32 1024, 1024
          %894 = vsyncadd %s885, %s893
          %s895 = smul.addr %s23, 8
          %s896 = smul.addr %s895, 128
          %s897 = scalar_lea.hbm %s3, %s896
          %s898 = sshll.u32 %s888, 4
          %s899 = int_to_ptr.vmem [resolvable:$true] %s898
          %904 = dma.vmem_to_hbm [thread:$0]  %s899, 1024, %s897, %s885, 256, 256, 16
        $region48: #{tpu_custom_call.1} parent=31 // pred_fallthru
          _
      $region32: #{tpu_custom_call.1} parent=5 // pred_fallthru
        _
      %p905 = scmp.le.s32.totalorder 2, %s18
      // Predicated region
      $region49: #{tpu_custom_call.1} parent=5 // pred_check
        %p906 = pneg %p905
      $region50: #{tpu_custom_call.1} parent=5 // pred_check_branch
        %908 = sbr.rel (%p906) target = $region52
      $region51: #{tpu_custom_call.1} parent=5 // pred_region
        %s909 = ssub.s32 %s18, 2
        // Predicated region
        $region53: #{tpu_custom_call.1} parent=51 // pred_check
          %p910 = pneg %p125
        $region54: #{tpu_custom_call.1} parent=51 // pred_check_branch
          %912 = sbr.rel (%p910) target = $region56
        $region55: #{tpu_custom_call.1} parent=51 // pred_region
          %s913 = sand.u32 %s110, 1
          %s914 = scalar_lea.sflag [#allocation4], %s913
          %s915 = sand.u32 %s110, 1
          %s916 = smul.addr %s915, 64
          %s917 = scalar_lea.vmem [#allocation8], %s916
          %918 = dma.done %s914, 1024
        $region56: #{tpu_custom_call.1} parent=51 // pred_fallthru
          _
      $region52: #{tpu_custom_call.1} parent=5 // pred_fallthru
        _
    $region6: #{tpu_custom_call.1} parent=1 // loop_footer
      %s22 = sadd.s32 1, %s18
    $region7: #{tpu_custom_call.1} parent=1 // loop_footer_branch
      %17 = sbr.rel target = $region3
    $region8: #{tpu_custom_call.1} parent=1 // loop_exit
      _
    %919 = vsyncpa [#allocation3], 1
    %s920 = scalar_lea.sflag [#allocation3], 1
    %921 = vsyncpa %s920, 1
    %922 = vsyncpa [#allocation6], 1
    %s923 = scalar_lea.sflag [#allocation6], 1
    %924 = vsyncpa %s923, 1
    %925 = vsyncpa [#allocation4], 1
    %s926 = scalar_lea.sflag [#allocation4], 1
    %927 = vsyncpa %s926, 1

</llo_original>
